<compile_context>
chip_gen: v7x
topology: tpu7x:2x2x1
jax: 0.10.0
libtpu: 0.0.40
codegen_flags: <defaults>
</compile_context>

<pallas_src>
import functools
import math

import jax
import jax.numpy as jnp
import numpy as np
from jax.experimental import pallas as pl
from jax.experimental.pallas import tpu as pltpu

BB_PAD = 128   # padded pooled-spatial axis (lane dim); requires sum(b*b) <= 128
BN_EPS = 1e-5


# ---------------------------------------------------------------------------
# Small helpers
# ---------------------------------------------------------------------------
def _round_up(v: int, m: int) -> int:
    return ((v + m - 1) // m) * m


def _vmem_budget_bytes() -> int:
    """Per-generation scoped-VMEM budget (~3/4 of physical VMEM)."""
    cap = 64 * 1024 * 1024                    # conservative default (v7x size)
    try:
        cap = int(getattr(pltpu.get_tpu_info(), "vmem_capacity_bytes", cap))
    except Exception:
        pass
    return (cap * 3) // 4                     # 48 MiB on v7x, 96 MiB on v5e/v6e


def _pick_channel_block(c_in: int, target: int) -> int:
    """Channel block for the phase-1 parallel axis: multiple of 8 dividing C_in."""
    if c_in <= target:
        return c_in
    blk = max(8, (target // 8) * 8)
    while blk >= 8:
        if c_in % blk == 0:
            return blk
        blk -= 8
    return c_in


def _pick_hw_tile(hw: int, tile_budget_bytes: int, bytes_per_col: int,
                  max_tile: int) -> tuple[int, int]:
    """Largest lane-dense (multiple-of-128) tile that fits the byte budget and
    keeps the zero-padding waste of round_up(hw, tile) under ~12.5%."""
    hw128 = _round_up(hw, 128)
    cap = max(128, tile_budget_bytes // max(bytes_per_col, 1))
    cap = min(hw128, max_tile, (cap // 128) * 128)
    cap = max(cap, 128)
    t = cap
    while t > 128:
        if (_round_up(hw, t) - hw128) * 8 <= hw128:
            break
        t -= 128
    return t, _round_up(hw, t)


# ---------------------------------------------------------------------------
# Kernel 1: fused adaptive-avg-pool for ALL bins (one 128-wide pooling GEMM).
# Grid: (C_in blocks ["parallel" -> megacore], H*W tiles ["arbitrary"]).
# x is read from HBM exactly once; the accumulator lives in VMEM scratch.
# ---------------------------------------------------------------------------
def _pool_kernel(x_ref, pT_ref, pooled_ref, acc_ref, *, matmul_dtype):
    t = pl.program_id(1)

    @pl.when(t == 0)
    def _init():
        acc_ref[...] = jnp.zeros_like(acc_ref)

    x = x_ref[...]                                   # (N, c_blk, T) f32
    n, c, tile = x.shape
    part = jnp.dot(x.reshape(n * c, tile).astype(matmul_dtype),
                   pT_ref[...],                      # (T, 128), matmul_dtype
                   preferred_element_type=jnp.float32)
    acc_ref[...] += part.reshape(n, c, BB_PAD)

    @pl.when(t == pl.num_programs(1) - 1)
    def _store():
        pooled_ref[...] = acc_ref[...]


# ---------------------------------------------------------------------------
# Kernel 1b: tiny run-once epilogue: 1x1 conv (stacked weights) -> BatchNorm
# (batch statistics, masked to each bin's own columns) -> ReLU.
# Keeping this out of kernel 1 frees the reduction pipeline's VMEM from the
# (potentially 16 MiB) conv weight and BN constants.
# ---------------------------------------------------------------------------
def _conv_bn_relu_kernel(pooled_ref, w_ref, gamma_ref, beta_ref, invcnt_ref,
                         mask_ref, y_ref, conv_sc, *, matmul_dtype):
    w = w_ref[...]                                   # (LC, C_in), matmul_dtype
    mask = mask_ref[...]                             # (LC, 128) 0/1
    n = pooled_ref.shape[0]
    lc = w_ref.shape[0]
    s1 = jnp.zeros((lc, 1), jnp.float32)
    s2 = jnp.zeros((lc, 1), jnp.float32)
    # Natural-orientation (LC,C_in)@(C_in,128) dots per batch sample: no hidden
    # transpose of an (N,128,LC) result.  Static unroll over the small batch.
    for i in range(n):
        conv_i = jnp.dot(w, pooled_ref[i].astype(matmul_dtype),
                         preferred_element_type=jnp.float32)   # (LC, 128)
        conv_sc[i] = conv_i
        cm = conv_i * mask
        s1 = s1 + jnp.sum(cm, axis=1, keepdims=True)
        s2 = s2 + jnp.sum(cm * conv_i, axis=1, keepdims=True)
    invcnt = invcnt_ref[...]                         # (LC, 1)   1/(N*b*b)
    mean = s1 * invcnt
    var = jnp.maximum(s2 * invcnt - mean * mean, 0.0)  # clamp E[x^2]-E[x]^2
    scale = gamma_ref[...] * jax.lax.rsqrt(var + BN_EPS)
    bias = beta_ref[...] - mean * scale
    for i in range(n):
        y_ref[i] = jnp.maximum(conv_sc[i] * scale + bias, 0.0)   # ReLU


# ---------------------------------------------------------------------------
# Kernel 2: per-bin bilinear upsample + fused channel concatenation with x.
# Grid: parallel over H*W output tiles (megacore on v7x).
# ---------------------------------------------------------------------------
def _upsample_concat_kernel(x_ref, y_ref, u_ref, o_ref, *,
                            c_in, c_out, num_bins, matmul_dtype):
    # Pass-through of x into the first c_in output channels (fused concat).
    o_ref[:, :c_in, :] = x_ref[...]

    y = y_ref[...]                                   # (N, L*C_out, 128) f32
    n = y.shape[0]
    tile = u_ref.shape[-1]
    for l in range(num_bins):                        # static, unrolled
        y_l = y[:, l * c_out:(l + 1) * c_out, :].reshape(n * c_out, BB_PAD)
        out_l = jnp.dot(y_l.astype(matmul_dtype), u_ref[l],
                        preferred_element_type=jnp.float32)     # (N*C_out, T)
        o_ref[:, c_in + l * c_out: c_in + (l + 1) * c_out, :] = (
            out_l.reshape(n, c_out, tile).astype(o_ref.dtype))


# ---------------------------------------------------------------------------
# Host-side constants (PyTorch AdaptiveAvgPool2d / bilinear align_corners=True)
# ---------------------------------------------------------------------------
def adaptive_pool_matrix(in_size: int, out_size: int) -> np.ndarray:
    A = np.zeros((out_size, in_size), dtype=np.float32)
    for i in range(out_size):
        start = (i * in_size) // out_size
        end = -((-(i + 1) * in_size) // out_size)
        A[i, start:end] = 1.0 / (end - start)
    return A


def bilinear_upsample_matrix(in_size: int, out_size: int) -> np.ndarray:
    U = np.zeros((out_size, in_size), dtype=np.float32)
    if in_size == 1:
        U[:, 0] = 1.0
        return U
    for i in range(out_size):
        s = i * (in_size - 1) / (out_size - 1) if out_size > 1 else 0.0
        h0 = min(int(math.floor(s)), in_size - 1)
        h1 = min(h0 + 1, in_size - 1)
        frac = s - h0
        U[i, h0] += 1.0 - frac
        U[i, h1] += frac
    return U


def _build_constants(N, H, W, hw_pad_pool, hw_pad_up, bins,
                     conv_weights, gammas, betas, matmul_dtype):
    HW = H * W
    L = len(bins)
    C_out = conv_weights[0].shape[0]
    LC = L * C_out
    offsets = np.cumsum([0] + [b * b for b in bins])
    assert offsets[-1] <= BB_PAD, "sum of b*b must fit in 128 padded lanes"

    pT = np.zeros((hw_pad_pool, BB_PAD), np.float32)    # pooling, pre-transposed
    U = np.zeros((L, BB_PAD, hw_pad_up), np.float32)    # upsample, pre-transposed
    mask = np.zeros((LC, BB_PAD), np.float32)           # valid columns per channel
    invcnt = np.zeros((LC, 1), np.float32)               # 1 / (N * b*b) per channel
    for l, b in enumerate(bins):
        off = int(offsets[l])
        bb = b * b
        Pl = np.kron(adaptive_pool_matrix(H, b), adaptive_pool_matrix(W, b))          # (bb, HW)
        Ul = np.kron(bilinear_upsample_matrix(b, H), bilinear_upsample_matrix(b, W))  # (HW, bb)
        pT[:HW, off:off + bb] = Pl.T
        U[l, off:off + bb, :HW] = Ul.T
        mask[l * C_out:(l + 1) * C_out, off:off + bb] = 1.0
        invcnt[l * C_out:(l + 1) * C_out, 0] = 1.0 / (N * bb)

    W_all = jnp.concatenate([jnp.asarray(w) for w in conv_weights],
                            axis=0).astype(matmul_dtype)          # (LC, C_in)
    gamma = jnp.concatenate(list(gammas)).reshape(LC, 1).astype(jnp.float32)
    beta = jnp.concatenate(list(betas)).reshape(LC, 1).astype(jnp.float32)
    return (jnp.asarray(pT, dtype=matmul_dtype), jnp.asarray(U, dtype=matmul_dtype),
            jnp.asarray(mask), jnp.asarray(invcnt), W_all, gamma, beta)


# ---------------------------------------------------------------------------
# Forward wrapper: three pallas_calls, output already concatenated.
# ---------------------------------------------------------------------------
def pyramid_pooling_forward(x, conv_weights, gammas, betas, bins, *,
                            matmul_dtype=jnp.bfloat16,   # production default
                            max_tile_cols=4096,
                            channel_block_target=512):
    N, C_in, H, W = x.shape
    HW = H * W
    L = len(bins)
    C_out = conv_weights[0].shape[0]
    LC = L * C_out
    C_total = C_in + LC
    msize = np.dtype(matmul_dtype).itemsize

    budget = _vmem_budget_bytes()
    usable = int(budget * 0.85)       # slack for compiler/internal scratch

    # --- Phase-1 tiling: channel block (parallel axis) + its own HW tile ----
    c_blk = _pick_channel_block(C_in, channel_block_target)
    n_cb = C_in // c_blk
    fixed1 = 3 * N * c_blk * BB_PAD * 4                        # acc + out block
    per_col1 = 2 * (N * c_blk * 4 + BB_PAD * msize)            # x + pT, 2x buffered
    tile1, hw_pad1 = _pick_hw_tile(HW, usable - fixed1, per_col1, max_tile_cols)
    n_t1 = hw_pad1 // tile1

    # --- Phase-2 tiling: decoupled; dominated by the (N, C_total, tile) block
    fixed2 = 2 * N * LC * BB_PAD * 4                            # y (small)
    per_col2 = 2 * (N * C_in * 4 + N * C_total * 4 + L * BB_PAD * msize)
    tile2, hw_pad2 = _pick_hw_tile(HW, usable - fixed2, per_col2, max_tile_cols)
    n_t2 = hw_pad2 // tile2

    hw_pad = max(hw_pad1, hw_pad2)
    x_flat = x.reshape(N, C_in, HW)
    if hw_pad != HW:
        # Zero-pad the spatial axis so every input block is lane-dense and
        # in-bounds; the final output keeps the true H*W (boundary stores are
        # clipped by the pipeline) so no unpad copy is needed.
        x_flat = jnp.pad(x_flat, ((0, 0), (0, 0), (0, hw_pad - HW)))

    pT, U, mask, invcnt, W_all, gamma, beta = _build_constants(
        N, H, W, hw_pad1, hw_pad2, bins, conv_weights, gammas, betas, matmul_dtype)

    # ---- Phase 1: pooling of all bins (reduction over HW per channel block) -
    pooled = pl.pallas_call(
        functools.partial(_pool_kernel, matmul_dtype=matmul_dtype),
        out_shape=jax.ShapeDtypeStruct((N, C_in, BB_PAD), jnp.float32),
        grid_spec=pltpu.PrefetchScalarGridSpec(
            num_scalar_prefetch=0,
            grid=(n_cb, n_t1),
            in_specs=[
                pl.BlockSpec((N, c_blk, tile1), lambda c, t: (0, c, t)),  # x
                pl.BlockSpec((tile1, BB_PAD), lambda c, t: (t, 0)),       # P^T
            ],
            out_specs=pl.BlockSpec((N, c_blk, BB_PAD), lambda c, t: (0, c, 0)),
            scratch_shapes=[pltpu.VMEM((N, c_blk, BB_PAD), jnp.float32)],
        ),
        compiler_params=pltpu.CompilerParams(
            dimension_semantics=("parallel", "arbitrary"),
            vmem_limit_bytes=budget),
    )(x_flat, pT)

    # ---- Phase 1b: run-once conv -> BN -> ReLU on the tiny pooled tensor ----
    # (Constant-index blocks here are fetched once; their footprint is small
    #  since they no longer sit inside the reduction pipeline.)
    y = pl.pallas_call(
        functools.partial(_conv_bn_relu_kernel, matmul_dtype=matmul_dtype),
        out_shape=jax.ShapeDtypeStruct((N, LC, BB_PAD), jnp.float32),
        grid_spec=pltpu.PrefetchScalarGridSpec(
            num_scalar_prefetch=0,
            grid=(1,),
            in_specs=[
                pl.BlockSpec((N, C_in, BB_PAD), lambda i: (0, 0, 0)),  # pooled
                pl.BlockSpec((LC, C_in), lambda i: (0, 0)),            # conv W
                pl.BlockSpec((LC, 1), lambda i: (0, 0)),               # gamma
                pl.BlockSpec((LC, 1), lambda i: (0, 0)),               # beta
                pl.BlockSpec((LC, 1), lambda i: (0, 0)),               # 1/count
                pl.BlockSpec((LC, BB_PAD), lambda i: (0, 0)),          # mask
            ],
            out_specs=pl.BlockSpec((N, LC, BB_PAD), lambda i: (0, 0, 0)),
            scratch_shapes=[pltpu.VMEM((N, LC, BB_PAD), jnp.float32)],
        ),
        compiler_params=pltpu.CompilerParams(
            dimension_semantics=("arbitrary",),
            vmem_limit_bytes=budget),
    )(pooled, W_all, gamma, beta, invcnt, mask)

    # ---- Phase 2: bilinear upsample per bin + fused concat with x -----------
    out_flat = pl.pallas_call(
        functools.partial(_upsample_concat_kernel, c_in=C_in, c_out=C_out,
                          num_bins=L, matmul_dtype=matmul_dtype),
        out_shape=jax.ShapeDtypeStruct((N, C_total, HW), jnp.float32),
        grid_spec=pltpu.PrefetchScalarGridSpec(
            num_scalar_prefetch=0,
            grid=(n_t2,),
            in_specs=[
                pl.BlockSpec((N, C_in, tile2), lambda t: (0, 0, t)),    # x tile
                pl.BlockSpec((N, LC, BB_PAD), lambda t: (0, 0, 0)),     # y (small)
                pl.BlockSpec((L, BB_PAD, tile2), lambda t: (0, 0, t)),  # U tile
            ],
            out_specs=pl.BlockSpec((N, C_total, tile2), lambda t: (0, 0, t)),
        ),
        compiler_params=pltpu.CompilerParams(
            dimension_semantics=("parallel",),
            vmem_limit_bytes=budget),
    )(x_flat, y, U)

    return out_flat.reshape(N, C_total, H, W)


# ---------------------------------------------------------------------------
# Pure-JAX f32 reference (PyTorch semantics) for the correctness check.
# ---------------------------------------------------------------------------
def pyramid_pooling_reference(x, conv_weights, gammas, betas, bins):
    N, C_in, H, W = x.shape
    HW = H * W
    x_flat = x.reshape(N, C_in, HW)
    outs = [x]
    for idx, b in enumerate(bins):
        C_out = conv_weights[idx].shape[0]
        P = jnp.asarray(np.kron(adaptive_pool_matrix(H, b), adaptive_pool_matrix(W, b)))
        U = jnp.asarray(np.kron(bilinear_upsample_matrix(b, H), bilinear_upsample_matrix(b, W)))
        pooled = jnp.einsum("ncs,bs->ncb", x_flat, P)
        conv = jnp.einsum("ncb,oc->nob", pooled, conv_weights[idx])
        mean = jnp.mean(conv, axis=(0, 2), keepdims=True)
        var = jnp.mean((conv - mean) ** 2, axis=(0, 2), keepdims=True)
        y = (conv - mean) * jax.lax.rsqrt(var + BN_EPS)
        y = y * gammas[idx].reshape(1, C_out, 1) + betas[idx].reshape(1, C_out, 1)
        y = jnp.maximum(y, 0.0)
        out = jnp.einsum("nob,sb->nos", y, U)
        outs.append(out.reshape(N, C_out, H, W))
    return jnp.concatenate(outs, axis=1)


if __name__ == "__main__":
    def run_case(N, C_in, C_out, H, W, bins, **fwd_kwargs):
        key = jax.random.PRNGKey(0)
        key, kx = jax.random.split(key)
        x = jax.random.normal(kx, (N, C_in, H, W), dtype=jnp.float32)
        conv_weights, gammas, betas = [], [], []
        for _ in bins:
            key, kw, kg, kb = jax.random.split(key, 4)
            conv_weights.append(
                jax.random.normal(kw, (C_out, C_in), dtype=jnp.float32)
                * math.sqrt(2.0 / C_in))
            gammas.append(jax.random.uniform(kg, (C_out,), jnp.float32, 0.5, 1.5))
            betas.append(jax.random.normal(kb, (C_out,), dtype=jnp.float32) * 0.1)

        # matmul_dtype=f32 keeps the comparison against the f32 reference tight
        # (production would use the bfloat16 default with looser tolerances).
        out = pyramid_pooling_forward(x, conv_weights, gammas, betas, bins,
                                      matmul_dtype=jnp.float32, **fwd_kwargs)
        out = jax.block_until_ready(out)
        assert out.shape == (N, C_in + C_out * len(bins), H, W), out.shape
        ref = pyramid_pooling_reference(x, conv_weights, gammas, betas, bins)
        assert jnp.allclose(out, ref, atol=2e-4, rtol=2e-4), float(
            jnp.max(jnp.abs(out - ref)))

    # Primary case (module-consistent small shapes): batch=2, in_channels=4,
    # out_channels=2, spatial=16x16, bins=(1,2,3,6).  max_tile_cols=128 forces
    # multi-step reduction and multi-tile upsample grids so the accumulator /
    # pipelined paths are exercised.
    run_case(2, 4, 2, 16, 16, (1, 2, 3, 6), max_tile_cols=128)

    # Secondary case: non-128-divisible spatial size (20x13 -> HW=260, padded
    # to 384 with boundary-clipped output stores) and C_in=16 split into two
    # channel blocks, exercising the parallel phase-1 channel axis.
    run_case(2, 16, 2, 20, 13, (1, 2, 3, 6),
             max_tile_cols=128, channel_block_target=8)

    print("KERNEL_OK")
</pallas_src>

<mosaic_0001>
module attributes {stable_mosaic.version = 11 : i64} {
  func.func @_pool_kernel(%arg0: i32, %arg1: i32, %arg2: memref<2x4x128xf32, #tpu.memory_space<vmem>>, %arg3: memref<128x128xf32, #tpu.memory_space<vmem>>, %arg4: memref<2x4x128xf32, #tpu.memory_space<vmem>>, %arg5: memref<2x4x128xf32, #tpu.memory_space<vmem>>) attributes {dimension_semantics = [#tpu.dimension_semantics<parallel>, #tpu.dimension_semantics<arbitrary>], iteration_bounds = array<i64: 1, 2>, scalar_prefetch = 0 : i64, scratch_operands = 1 : i64, tpu.core_type = #tpu.core_type<tc>, window_params = [{transform_indices = @transform_0, window_bounds = array<i64: 2, 4, 128>}, {transform_indices = @transform_1, window_bounds = array<i64: 128, 128>}, {transform_indices = @transform_2, window_bounds = array<i64: 2, 4, 128>}]} {
    %c0_i32 = arith.constant 0 : i32
    %0 = arith.cmpi eq, %arg1, %c0_i32 : i32
    %1 = arith.extui %0 : i1 to i32
    %c0_i32_0 = arith.constant 0 : i32
    %2 = arith.cmpi ne, %1, %c0_i32_0 : i32
    scf.if %2 {
      %cst_12 = arith.constant 0.000000e+00 : f32
      %14 = vector.broadcast %cst_12 : f32 to vector<2x4x128xf32>
      %c0_13 = arith.constant 0 : index
      %c0_14 = arith.constant 0 : index
      %c0_15 = arith.constant 0 : index
      %15 = vector.load %arg5[%c0_13, %c0_14, %c0_15] : memref<2x4x128xf32, #tpu.memory_space<vmem>>, vector<2x4x128xf32>
      tpu.vector_store %arg5[%c0_13, %c0_14, %c0_15], %14 {strides = array<i32>} : memref<2x4x128xf32, #tpu.memory_space<vmem>>, vector<2x4x128xf32>,
    } else {
    }
    %c0 = arith.constant 0 : index
    %c0_1 = arith.constant 0 : index
    %c0_2 = arith.constant 0 : index
    %3 = vector.load %arg2[%c0, %c0_1, %c0_2] : memref<2x4x128xf32, #tpu.memory_space<vmem>>, vector<2x4x128xf32>
    %4 = vector.shape_cast %3 : vector<2x4x128xf32> to vector<8x128xf32>
    %c0_3 = arith.constant 0 : index
    %c0_4 = arith.constant 0 : index
    %5 = vector.load %arg3[%c0_3, %c0_4] : memref<128x128xf32, #tpu.memory_space<vmem>>, vector<128x128xf32>
    %cst = arith.constant dense<0.000000e+00> : vector<8x128xf32>
    %6 = tpu.matmul %4, %5, %cst {dimension_numbers = #tpu.dot_dimension_numbers<[1], [0], [0], [1], [0, 0, 1, 1], [], []>} : vector<8x128xf32>, vector<128x128xf32>, vector<8x128xf32> -> vector<8x128xf32>
    %c0_5 = arith.constant 0 : index
    %c0_6 = arith.constant 0 : index
    %c0_7 = arith.constant 0 : index
    %7 = vector.load %arg5[%c0_5, %c0_6, %c0_7] : memref<2x4x128xf32, #tpu.memory_space<vmem>>, vector<2x4x128xf32>
    %8 = vector.shape_cast %6 : vector<8x128xf32> to vector<2x4x128xf32>
    %9 = arith.addf %7, %8 : vector<2x4x128xf32>
    %c0_8 = arith.constant 0 : index
    %c0_9 = arith.constant 0 : index
    %c0_10 = arith.constant 0 : index
    %10 = vector.load %arg5[%c0_8, %c0_9, %c0_10] : memref<2x4x128xf32, #tpu.memory_space<vmem>>, vector<2x4x128xf32>
    tpu.vector_store %arg5[%c0_8, %c0_9, %c0_10], %9 {strides = array<i32>} : memref<2x4x128xf32, #tpu.memory_space<vmem>>, vector<2x4x128xf32>,
    %c1_i32 = arith.constant 1 : i32
    %11 = arith.cmpi eq, %arg1, %c1_i32 : i32
    %12 = arith.extui %11 : i1 to i32
    %c0_i32_11 = arith.constant 0 : i32
    %13 = arith.cmpi ne, %12, %c0_i32_11 : i32
    scf.if %13 {
      %c0_12 = arith.constant 0 : index
      %c0_13 = arith.constant 0 : index
      %c0_14 = arith.constant 0 : index
      %14 = vector.load %arg5[%c0_12, %c0_13, %c0_14] : memref<2x4x128xf32, #tpu.memory_space<vmem>>, vector<2x4x128xf32>
      %c0_15 = arith.constant 0 : index
      %c0_16 = arith.constant 0 : index
      %c0_17 = arith.constant 0 : index
      %15 = vector.load %arg4[%c0_15, %c0_16, %c0_17] : memref<2x4x128xf32, #tpu.memory_space<vmem>>, vector<2x4x128xf32>
      tpu.vector_store %arg4[%c0_15, %c0_16, %c0_17], %14 {strides = array<i32>} : memref<2x4x128xf32, #tpu.memory_space<vmem>>, vector<2x4x128xf32>,
    } else {
    }
    return
  }
  func.func @transform_0(%arg0: i32, %arg1: i32) -> (i32, i32, i32) {
    %c0_i32 = arith.constant 0 : i32
    %c0_i32_0 = arith.constant 0 : i32
    return %c0_i32, %arg0, %arg1 : i32, i32, i32
  }
  func.func @transform_1(%arg0: i32, %arg1: i32) -> (i32, i32) {
    %c0_i32 = arith.constant 0 : i32
    %c0_i32_0 = arith.constant 0 : i32
    return %arg1, %c0_i32 : i32, i32
  }
  func.func @transform_2(%arg0: i32, %arg1: i32) -> (i32, i32, i32) {
    %c0_i32 = arith.constant 0 : i32
    %c0_i32_0 = arith.constant 0 : i32
    %c0_i32_1 = arith.constant 0 : i32
    return %c0_i32, %arg0, %c0_i32_0 : i32, i32, i32
  }
}

</mosaic_0001>

<llo_original>
// kernel: tpu_custom_call.1
$region0: #{tpu_custom_call.1}
  #allocation0 [shape = 'u32[]', space=smem, size = 0x4, offset = 0x4, fixed_abs, tag = 'smem constant byte address 0x4 - core index']
  #allocation1 [shape = 'u32[144,128]{1,0:T(1,128)}', space=vmem, size = 0x12000, scoped, tag = 'internal scratch']
  #allocation2 [shape = 'f32[2,4,128]{2,1,0:T(4,128)}', space=vmem, size = 0x1000, scoped, tag = 'scratch operand']
  %s0 = inlined_call_operand.hbm [shape: f32[2,4,256], index: 0, kind: input, shape index: {}]
  %s1 = inlined_call_operand.hbm [shape: f32[256,128], index: 1, kind: input, shape index: {}]
  %s2 = inlined_call_operand.hbm [shape: f32[2,4,128], index: 2, kind: output, shape index: {}]
  %s3 = sld [smem:[#allocation0]]
  $region57: #{tpu_custom_call.1} parent=0
    _
  %s5 = ssub.s32 1, %s3
  %s6 = scalar_select 0, %s5, %s3
  $region1: #{tpu_custom_call.1} parent=0
    #allocation3 [shape = 'u8[8192]{0}', space=vmem, size = 0x2000, scoped, tag = 'input window, operand 0']
    #allocation4 [shape = 's32[2]{0}', space=sflag, size = 0x8, scoped, tag = 'scoped memory for tpu_custom_call.1']
    #allocation5 [shape = 's32[2]{0}', space=sflag, size = 0x8, scoped, tag = 'scoped memory for tpu_custom_call.1']
    #allocation6 [shape = 'u8[131072]{0}', space=vmem, size = 0x20000, scoped, tag = 'input window, operand 1']
    #allocation7 [shape = 's32[2]{0}', space=sflag, size = 0x8, scoped, tag = 'scoped memory for tpu_custom_call.1']
    #allocation8 [shape = 'u8[4096]{0}', space=vmem, size = 0x1000, scoped, tag = 'output window, operand 0, single buffered']
    %7 = vsyncpa [#allocation4], 0
    %s8 = scalar_lea.sflag [#allocation4], 1
    %9 = vsyncpa %s8, 0
    %10 = vsyncpa [#allocation7], 0
    %s11 = scalar_lea.sflag [#allocation7], 1
    %12 = vsyncpa %s11, 0
    %13 = vsyncpa [#allocation5], 0
    loop: start=0, step=1, limit=4
    $region2: #{tpu_custom_call.1} parent=1 // loop_pre_header
      _
    $region3: #{tpu_custom_call.1} parent=1 // loop_header
      %s15 = sphi 0, %s19
      %p16 = scmp.ge.s32.totalorder %s15, 4
      %s22 = sphi 0, %s34
      %s23 = sphi 0, %s30
      %s24 = sphi 0, %s22
      %s25 = sphi 0, %s23
      %s26 = sphi 0, %s24
      %s27 = sphi 0, %s25
      %s39 = sphi 0, %s41
      %s42 = sphi 0, %s39
      %s43 = sphi 0, %s42
      %s59 = sphi 0, %s43
      %s65 = sphi 0, %s67
      %s68 = sphi 0, %s65
      %s69 = sphi 0, %s68
      %s85 = sphi 0, %s69
      %s91 = sphi 0, %s93
      %s94 = sphi 0, %s91
      %s95 = sphi 0, %s94
      %s111 = sphi 0, %s95
    $region4: #{tpu_custom_call.1} parent=1 // loop_header_branch
      %18 = sbr.rel (%p16) target = $region8
    $region5: #{tpu_custom_call.1} parent=1 // loop_body
      %s20 = ssub.s32 %s15, 1
      %s21 = ssub.s32 %s15, 2
      %s28 = sadd.s32 1, %s23
      %p29 = scmp.ge.s32.totalorder %s28, 2
      %s30 = scalar_select %p29, 0, %s28
      %s31 = sadd.s32 1, %s22
      %s32 = scalar_select %p29, %s31, %s22
      %p33 = scmp.ge.s32.totalorder %s32, 1
      %s34 = scalar_select %p33, 0, %s32
      %s35 = ssub.s32 %s22, %s34
      %s36 = ssub.s32 %s23, %s30
      %s37 = sor.u32 %s35, %s36
      %p38 = scmp.eq.s32.totalorder %s37, 0
      %s40 = sadd.s32 %s39, 1
      %s41 = scalar_select %p38, %s39, %s40
      %p44 = pneg %p38
      %p45 = scmp.eq.s32.totalorder %s15, 1
      %p46 = por %p44, %p45
      %p47 = scmp.ne.s32.totalorder %s39, %s42
      %p48 = scmp.eq.s32.totalorder %s15, 0
      %p49 = por %p47, %p48
      %p50 = scmp.ne.s32.totalorder %s39, %s42
      %p51 = scmp.eq.s32.totalorder %s20, 1
      %p52 = por %p50, %p51
      %p53 = scmp.ne.s32.totalorder %s42, %s43
      %p54 = scmp.eq.s32.totalorder %s20, 0
      %p55 = por %p53, %p54
      %p56 = scmp.ne.s32.totalorder %s42, %s43
      %p57 = scmp.eq.s32.totalorder %s21, 1
      %p58 = por %p56, %p57
      %p60 = scmp.ne.s32.totalorder %s43, %s59
      %p61 = scmp.eq.s32.totalorder %s21, 0
      %p62 = por %p60, %p61
      %s63 = ssub.s32 %s23, %s30
      %p64 = scmp.eq.s32.totalorder %s63, 0
      %s66 = sadd.s32 %s65, 1
      %s67 = scalar_select %p64, %s65, %s66
      %p70 = pneg %p64
      %p71 = scmp.eq.s32.totalorder %s15, 1
      %p72 = por %p70, %p71
      %p73 = scmp.ne.s32.totalorder %s65, %s68
      %p74 = scmp.eq.s32.totalorder %s15, 0
      %p75 = por %p73, %p74
      %p76 = scmp.ne.s32.totalorder %s65, %s68
      %p77 = scmp.eq.s32.totalorder %s20, 1
      %p78 = por %p76, %p77
      %p79 = scmp.ne.s32.totalorder %s68, %s69
      %p80 = scmp.eq.s32.totalorder %s20, 0
      %p81 = por %p79, %p80
      %p82 = scmp.ne.s32.totalorder %s68, %s69
      %p83 = scmp.eq.s32.totalorder %s21, 1
      %p84 = por %p82, %p83
      %p86 = scmp.ne.s32.totalorder %s69, %s85
      %p87 = scmp.eq.s32.totalorder %s21, 0
      %p88 = por %p86, %p87
      %s89 = ssub.s32 %s22, %s34
      %p90 = scmp.eq.s32.totalorder %s89, 0
      %s92 = sadd.s32 %s91, 1
      %s93 = scalar_select %p90, %s91, %s92
      %p96 = pneg %p90
      %p97 = scmp.eq.s32.totalorder %s15, 1
      %p98 = por %p96, %p97
      %p99 = scmp.ne.s32.totalorder %s91, %s94
      %p100 = scmp.eq.s32.totalorder %s15, 0
      %p101 = por %p99, %p100
      %p102 = scmp.ne.s32.totalorder %s91, %s94
      %p103 = scmp.eq.s32.totalorder %s20, 1
      %p104 = por %p102, %p103
      %p105 = scmp.ne.s32.totalorder %s94, %s95
      %p106 = scmp.eq.s32.totalorder %s20, 0
      %p107 = por %p105, %p106
      %p108 = scmp.ne.s32.totalorder %s94, %s95
      %p109 = scmp.eq.s32.totalorder %s21, 1
      %p110 = por %p108, %p109
      %p112 = scmp.ne.s32.totalorder %s95, %s111
      %p113 = scmp.eq.s32.totalorder %s21, 0
      %p114 = por %p112, %p113
      %p115 = scmp.le.s32.totalorder 1, %s15
      %p116 = scmp.lt.s32.totalorder %s15, 3
      %p117 = pnand %p115, %p116
      %p118 = pneg %p117
      // Predicated region
      $region9: #{tpu_custom_call.1} parent=5 // pred_check
        _
      $region10: #{tpu_custom_call.1} parent=5 // pred_check_branch
        %120 = sbr.rel (%p117) target = $region12
      $region11: #{tpu_custom_call.1} parent=5 // pred_region
        %s121 = ssub.s32 %s15, 1
      $region12: #{tpu_custom_call.1} parent=5 // pred_fallthru
        _
      %p122 = scmp.lt.s32.totalorder %s15, 2
      // Predicated region
      $region13: #{tpu_custom_call.1} parent=5 // pred_check
        %p123 = pneg %p122
      $region14: #{tpu_custom_call.1} parent=5 // pred_check_branch
        %125 = sbr.rel (%p123) target = $region16
      $region15: #{tpu_custom_call.1} parent=5 // pred_region
        // Predicated region
        $region17: #{tpu_custom_call.1} parent=15 // pred_check
          %p126 = pneg %p49
        $region18: #{tpu_custom_call.1} parent=15 // pred_check_branch
          %128 = sbr.rel (%p126) target = $region20
        $region19: #{tpu_custom_call.1} parent=15 // pred_region
          %s129 = sand.u32 %s39, 1
          %s130 = scalar_lea.sflag [#allocation4], %s129
          %s131 = sand.u32 %s39, 1
          %s132 = smul.addr %s131, 8
          %s133 = scalar_lea.vmem [#allocation3], %s132
          %s135 = ssub.s32 128, 128
          %136 = vsyncadd %s130, %s135
          %s137 = smul.addr %s22, 2
          %s138 = sadd.s32 %s23, %s137
          %s139 = smul.addr %s138, 64
          %s140 = scalar_lea.hbm %s0, %s139
          %s141 = sshll.u32 %s133, 4
          %s142 = int_to_ptr.vmem [resolvable:$true] %s141
          %147 = dma.hbm_to_vmem [thread:$0]  %s140, 128, %s142, %s130, 128, 64, 4
        $region20: #{tpu_custom_call.1} parent=15 // pred_fallthru
          _
        // Predicated region
        $region21: #{tpu_custom_call.1} parent=15 // pred_check
          %p148 = pneg %p75
        $region22: #{tpu_custom_call.1} parent=15 // pred_check_branch
          %150 = sbr.rel (%p148) target = $region24
        $region23: #{tpu_custom_call.1} parent=15 // pred_region
          %s151 = sand.u32 %s65, 1
          %s152 = scalar_lea.sflag [#allocation7], %s151
          %s153 = sand.u32 %s65, 1
          %s154 = smul.addr %s153, 128
          %s155 = scalar_lea.vmem [#allocation6], %s154
          %s156 = smul.u32 16, %s23
          %s158 = ssub.s32 2048, 2048
          %159 = vsyncadd %s152, %s158
          %s160 = smul.addr %s156, 128
          %s161 = scalar_lea.hbm %s1, %s160
          %s162 = sshll.u32 %s155, 4
          %s163 = int_to_ptr.vmem [resolvable:$true] %s162
          %168 = dma.hbm_to_vmem [thread:$0]  %s161, 2048, %s163, %s152, 128, 128, 8
        $region24: #{tpu_custom_call.1} parent=15 // pred_fallthru
          _
      $region16: #{tpu_custom_call.1} parent=5 // pred_fallthru
        _
      %p169 = scmp.le.s32.totalorder 1, %s15
      %p170 = scmp.lt.s32.totalorder %s15, 3
      %p171 = pnand %p169, %p170
      %p172 = pneg %p171
      // Predicated region
      $region25: #{tpu_custom_call.1} parent=5 // pred_check
        _
      $region26: #{tpu_custom_call.1} parent=5 // pred_check_branch
        %174 = sbr.rel (%p171) target = $region28
      $region27: #{tpu_custom_call.1} parent=5 // pred_region
        %s175 = ssub.s32 %s15, 1
        %s176 = sand.u32 %s42, 1
        %s177 = scalar_lea.sflag [#allocation4], %s176
        %s178 = sand.u32 %s42, 1
        %s179 = smul.addr %s178, 8
        %s180 = scalar_lea.vmem [#allocation3], %s179
        // Predicated region
        $region29: #{tpu_custom_call.1} parent=27 // pred_check
          %p181 = pneg %p55
        $region30: #{tpu_custom_call.1} parent=27 // pred_check_branch
          %183 = sbr.rel (%p181) target = $region32
        $region31: #{tpu_custom_call.1} parent=27 // pred_region
          %184 = dma.done %s177, 128
        $region32: #{tpu_custom_call.1} parent=27 // pred_fallthru
          _
        %s185 = sand.u32 %s68, 1
        %s186 = scalar_lea.sflag [#allocation7], %s185
        %s187 = sand.u32 %s68, 1
        %s188 = smul.addr %s187, 128
        %s189 = scalar_lea.vmem [#allocation6], %s188
        // Predicated region
        $region33: #{tpu_custom_call.1} parent=27 // pred_check
          %p190 = pneg %p81
        $region34: #{tpu_custom_call.1} parent=27 // pred_check_branch
          %192 = sbr.rel (%p190) target = $region36
        $region35: #{tpu_custom_call.1} parent=27 // pred_region
          %193 = dma.done %s186, 2048
        $region36: #{tpu_custom_call.1} parent=27 // pred_fallthru
          _
        %s194 = sand.u32 %s42, 1
        %s195 = scalar_lea.sflag [#allocation4], %s194
        %s196 = sand.u32 %s42, 1
        %s197 = smul.addr %s196, 8
        %s198 = scalar_lea.vmem [#allocation3], %s197
        %p199 = pneg %p55
        %p200 = pneg %p52
        %s201 = sand.u32 %s68, 1
        %s202 = scalar_lea.sflag [#allocation7], %s201
        %s203 = sand.u32 %s68, 1
        %s204 = smul.addr %s203, 128
        %s205 = scalar_lea.vmem [#allocation6], %s204
        %p206 = pneg %p81
        %p207 = pneg %p78
        %p208 = pneg %p107
        %p209 = pneg %p104
        %s210 = smul.u32 16, %s25
        %p211 = scmp.eq.s32.totalorder %s25, 0
        // Predicated region
        $region37: #{tpu_custom_call.1} parent=27 // pred_check
          %p212 = pneg %p211
        $region38: #{tpu_custom_call.1} parent=27 // pred_check_branch
          %214 = sbr.rel (%p212) target = $region40
        $region39: #{tpu_custom_call.1} parent=27 // pred_region
          %215 = vst [vmem:[#allocation2] sm:$0xf] 0.0
          %216 = vst [vmem:[#allocation2 + $0x4] sm:$0xf] 0.0
        $region40: #{tpu_custom_call.1} parent=27 // pred_fallthru
          _
        %v217 = vld [vmem:[%s180] sm:$0xf]
        %v218 = vld [vmem:[%s180 + $0x4] sm:$0xf]
        %v219 = vld [vmem:[%s189] sm:$0xff]
        %v220 = vld [vmem:[%s189 + $0x8] sm:$0xff]
        %v221 = vld [vmem:[%s189 + $0x10] sm:$0xff]
        %v222 = vld [vmem:[%s189 + $0x18] sm:$0xff]
        %v223 = vld [vmem:[%s189 + $0x20] sm:$0xff]
        %v224 = vld [vmem:[%s189 + $0x28] sm:$0xff]
        %v225 = vld [vmem:[%s189 + $0x30] sm:$0xff]
        %v226 = vld [vmem:[%s189 + $0x38] sm:$0xff]
        %v227 = vld [vmem:[%s189 + $0x40] sm:$0xff]
        %v228 = vld [vmem:[%s189 + $0x48] sm:$0xff]
        %v229 = vld [vmem:[%s189 + $0x50] sm:$0xff]
        %v230 = vld [vmem:[%s189 + $0x58] sm:$0xff]
        %v231 = vld [vmem:[%s189 + $0x60] sm:$0xff]
        %v232 = vld [vmem:[%s189 + $0x68] sm:$0xff]
        %v233 = vld [vmem:[%s189 + $0x70] sm:$0xff]
        %v234 = vld [vmem:[%s189 + $0x78] sm:$0xff]
        %v237 = vcombine.low %v217, %v218
        %239 = vmatprep.subr.mxu0 0.0
        %240 = vmatpush1.msra.mxu0 %v219
        %241 = vmatprep.subr.mxu0 0.0
        %242 = vmatpush1.msra.mxu0 %v220
        %243 = vmatprep.subr.mxu0 0.0
        %244 = vmatpush1.msra.mxu0 %v221
        %245 = vmatprep.subr.mxu0 0.0
        %246 = vmatpush1.msra.mxu0 %v222
        %247 = vmatprep.subr.mxu0 0.0
        %248 = vmatpush1.msra.mxu0 %v223
        %249 = vmatprep.subr.mxu0 0.0
        %250 = vmatpush1.msra.mxu0 %v224
        %251 = vmatprep.subr.mxu0 0.0
        %252 = vmatpush1.msra.mxu0 %v225
        %253 = vmatprep.subr.mxu0 0.0
        %254 = vmatpush1.msra.mxu0 %v226
        %255 = vmatprep.subr.mxu0 0.0
        %256 = vmatpush1.msra.mxu0 %v227
        %257 = vmatprep.subr.mxu0 0.0
        %258 = vmatpush1.msra.mxu0 %v228
        %259 = vmatprep.subr.mxu0 0.0
        %260 = vmatpush1.msra.mxu0 %v229
        %261 = vmatprep.subr.mxu0 0.0
        %262 = vmatpush1.msra.mxu0 %v230
        %263 = vmatprep.subr.mxu0 0.0
        %264 = vmatpush1.msra.mxu0 %v231
        %265 = vmatprep.subr.mxu0 0.0
        %266 = vmatpush1.msra.mxu0 %v232
        %267 = vmatprep.subr.mxu0 0.0
        %268 = vmatpush1.msra.mxu0 %v233
        %269 = vmatprep.subr.mxu0 0.0
        %270 = vmatpush1.msra.mxu0 %v234
        %271 = vmatprep.subr.mxu0 0.0
        %272 = vmatpush1.msra.mxu0 0.0
        %273 = vmatprep.subr.mxu0 0.0
        %274 = vmatpush1.msra.mxu0 0.0
        %275 = vmatprep.subr.mxu0 0.0
        %276 = vmatpush1.msra.mxu0 0.0
        %277 = vmatprep.subr.mxu0 0.0
        %278 = vmatpush1.msra.mxu0 0.0
        %279 = vmatprep.subr.mxu0 0.0
        %280 = vmatpush1.msra.mxu0 0.0
        %281 = vmatprep.subr.mxu0 0.0
        %282 = vmatpush1.msra.mxu0 0.0
        %283 = vmatprep.subr.mxu0 0.0
        %284 = vmatpush1.msra.mxu0 0.0
        %285 = vmatprep.subr.mxu0 0.0
        %286 = vmatpush1.msra.mxu0 0.0
        %287 = vmatprep.subr.mxu0 0.0
        %288 = vmatpush1.msra.mxu0 0.0
        %289 = vmatprep.subr.mxu0 0.0
        %290 = vmatpush1.msra.mxu0 0.0
        %291 = vmatprep.subr.mxu0 0.0
        %292 = vmatpush1.msra.mxu0 0.0
        %293 = vmatprep.subr.mxu0 0.0
        %294 = vmatpush1.msra.mxu0 0.0
        %295 = vmatprep.subr.mxu0 0.0
        %296 = vmatpush1.msra.mxu0 0.0
        %297 = vmatprep.subr.mxu0 0.0
        %298 = vmatpush1.msra.mxu0 0.0
        %299 = vmatprep.subr.mxu0 0.0
        %300 = vmatpush1.msra.mxu0 0.0
        %301 = vmatprep.subr.mxu0 0.0
        %302 = vmatpush1.msra.mxu0 0.0
        %303 = vmatprep.mubr.f32.mxu0 0.0
        %304 = vmatmul.mubr.f32.gmra.mrb[0].mxu0 %v237
        %v305 = vpop.f32.mrb[0].mxu0
        %v306 = vadd.f32 0.0, %v305
        %v307 = vpop.f32.mrb[0].mxu0
        %308 = vdwg.mxu0
        %v309 = vld [vmem:[#allocation2] sm:$0xf]
        %v310 = vld [vmem:[#allocation2 + $0x4] sm:$0xf]
        %v312 = vcombine.high %v306, %v306
        %v314 = vadd.f32 %v309, %v306
        %v315 = vadd.f32 %v310, %v312
        %316 = vst [vmem:[#allocation2] sm:$0xf] %v314
        %317 = vst [vmem:[#allocation2 + $0x4] sm:$0xf] %v315
        %p318 = scmp.eq.s32.totalorder %s25, 1
        // Predicated region
        $region41: #{tpu_custom_call.1} parent=27 // pred_check
          %p319 = pneg %p318
        $region42: #{tpu_custom_call.1} parent=27 // pred_check_branch
          %321 = sbr.rel (%p319) target = $region44
        $region43: #{tpu_custom_call.1} parent=27 // pred_region
          %v322 = vld [vmem:[#allocation2] sm:$0xf]
          %v323 = vld [vmem:[#allocation2 + $0x4] sm:$0xf]
          %324 = vst [vmem:[#allocation8] sm:$0xf] %v322
          %325 = vst [vmem:[#allocation8 + $0x4] sm:$0xf] %v323
        $region44: #{tpu_custom_call.1} parent=27 // pred_fallthru
          _
        // Predicated region
        $region45: #{tpu_custom_call.1} parent=27 // pred_check
          %p326 = pneg %p104
        $region46: #{tpu_custom_call.1} parent=27 // pred_check_branch
          %328 = sbr.rel (%p326) target = $region48
        $region47: #{tpu_custom_call.1} parent=27 // pred_region
          %s330 = ssub.s32 128, 128
          %331 = vsyncadd [#allocation5], %s330
          %s332 = smul.addr %s24, 64
          %s333 = scalar_lea.hbm %s2, %s332
          %s334 = sshll.u32 [#allocation8], 4
          %s335 = int_to_ptr.vmem [resolvable:$true] %s334
          %340 = dma.vmem_to_hbm [thread:$0]  %s335, 128, %s333, [#allocation5], 64, 64, 4
        $region48: #{tpu_custom_call.1} parent=27 // pred_fallthru
          _
        // Predicated region
        $region49: #{tpu_custom_call.1} parent=27 // pred_check
          %p341 = pneg %p104
        $region50: #{tpu_custom_call.1} parent=27 // pred_check_branch
          %343 = sbr.rel (%p341) target = $region52
        $region51: #{tpu_custom_call.1} parent=27 // pred_region
          %344 = dma.done [#allocation5], 128
        $region52: #{tpu_custom_call.1} parent=27 // pred_fallthru
          _
      $region28: #{tpu_custom_call.1} parent=5 // pred_fallthru
        _
      %p345 = scmp.le.s32.totalorder 2, %s15
      // Predicated region
      $region53: #{tpu_custom_call.1} parent=5 // pred_check
        %p346 = pneg %p345
      $region54: #{tpu_custom_call.1} parent=5 // pred_check_branch
        %348 = sbr.rel (%p346) target = $region56
      $region55: #{tpu_custom_call.1} parent=5 // pred_region
        %s349 = ssub.s32 %s15, 2
      $region56: #{tpu_custom_call.1} parent=5 // pred_fallthru
        _
    $region6: #{tpu_custom_call.1} parent=1 // loop_footer
      %s19 = sadd.s32 1, %s15
    $region7: #{tpu_custom_call.1} parent=1 // loop_footer_branch
      %14 = sbr.rel target = $region3
    $region8: #{tpu_custom_call.1} parent=1 // loop_exit
      _
    %350 = vsyncpa [#allocation4], 1
    %s351 = scalar_lea.sflag [#allocation4], 1
    %352 = vsyncpa %s351, 1
    %353 = vsyncpa [#allocation7], 1
    %s354 = scalar_lea.sflag [#allocation7], 1
    %355 = vsyncpa %s354, 1
    %356 = vsyncpa [#allocation5], 1
    %s357 = scalar_lea.sflag [#allocation5], 1
    %358 = vsyncpa %s357, 1

</llo_original>
